<compile_context>
chip_gen: v5e
topology: v5e:2x2
jax: 0.10.0
libtpu: 0.0.40
codegen_flags: <defaults>
</compile_context>

<pallas_src>
import functools

import jax
import jax.numpy as jnp
from jax.experimental import pallas as pl
from jax.experimental.pallas import tpu as pltpu

EPS = 1e-08

# Per-block VMEM budget (bytes): 2 MiB blocks x (2 in + 2 out double buffers)
# fits the default scoped VMEM on v5e (16 MiB) / v6e (32 MiB) / v7x (32 MiB)
# with headroom, while keeping K tiles >= 512 lanes for typical channel counts.
_BLOCK_BUDGET = 2 * 1024 * 1024
_VMEM_LIMIT = 32 * 1024 * 1024   # <= default scoped limit on v6e/v7x, > v5e default


def _round_down(x, m):
    return (x // m) * m


# ----------------------------------------------------------------------------
# Small path: whole (Mb, N, K) rows per grid step.
# ----------------------------------------------------------------------------
def _gln_small_kernel(y_ref, gamma_ref, beta_ref, o_ref):
    # y_ref: (Mb, N, K) ; gamma_ref / beta_ref: (N, 1)
    y = y_ref[...].astype(jnp.float32)
    _, n, k = y_ref.shape
    inv_cnt = 1.0 / float(n * k)

    # One fused sweep over the block: lane reduce then sublane reduce.
    s = jnp.sum(jnp.sum(y, axis=2, keepdims=True), axis=1, keepdims=True)       # (Mb,1,1)
    ss = jnp.sum(jnp.sum(y * y, axis=2, keepdims=True), axis=1, keepdims=True)  # (Mb,1,1)

    mean = s * inv_cnt
    var = ss * inv_cnt - mean * mean
    inv_std = jax.lax.rsqrt(jnp.maximum(var, 0.0) + EPS)

    # Fused affine: out = y * a + b  (2 VALU ops per element).
    g = gamma_ref[...].astype(jnp.float32)[None]   # (1, N, 1)
    bt = beta_ref[...].astype(jnp.float32)[None]   # (1, N, 1)
    a = g * inv_std                                # (Mb, N, 1)
    b = bt - mean * a                              # (Mb, N, 1)
    o_ref[...] = (y * a + b).astype(o_ref.dtype)


# ----------------------------------------------------------------------------
# Tiled path: grid = (M, 2 phases, nK).  Phase 0 accumulates per-channel
# partial sums over K tiles; phase 1 computes the coefficients once and streams
# the normalized tiles out.
# ----------------------------------------------------------------------------
def _gln_tiled_kernel(y_ref, gamma_ref, beta_ref, o_ref,
                      s_ref, ss_ref, a_ref, b_ref,
                      *, kt, k_total, inv_count, need_mask):
    p = pl.program_id(1)   # 0 = stats sweep, 1 = normalize sweep
    k = pl.program_id(2)

    @pl.when(p == 0)
    def _stats():
        @pl.when(k == 0)
        def _init():
            s_ref[...] = jnp.zeros_like(s_ref)
            ss_ref[...] = jnp.zeros_like(ss_ref)

        y = y_ref[0].astype(jnp.float32)            # (N, Kt)
        if need_mask:                               # static: only for remainder tiles
            lane = jax.lax.broadcasted_iota(jnp.int32, y.shape, 1)
            valid = (k * kt + lane) < k_total
            y = jnp.where(valid, y, 0.0)
        s_ref[...] += jnp.sum(y, axis=1, keepdims=True)        # (N, 1)
        ss_ref[...] += jnp.sum(y * y, axis=1, keepdims=True)   # (N, 1)

    @pl.when(p == 1)
    def _normalize():
        @pl.when(k == 0)
        def _coef():
            mean = jnp.sum(s_ref[...]) * inv_count
            var = jnp.sum(ss_ref[...]) * inv_count - mean * mean
            inv_std = jax.lax.rsqrt(jnp.maximum(var, 0.0) + EPS)
            g = gamma_ref[...].astype(jnp.float32)
            bt = beta_ref[...].astype(jnp.float32)
            a = g * inv_std
            a_ref[...] = a
            b_ref[...] = bt - mean * a

        y = y_ref[0].astype(jnp.float32)            # (N, Kt)
        o_ref[0] = (y * a_ref[...] + b_ref[...]).astype(o_ref.dtype)


# ----------------------------------------------------------------------------
# Wrapper
# ----------------------------------------------------------------------------
def global_layer_norm(y, gamma, beta, *, block_budget_bytes=_BLOCK_BUDGET):
    """gLN. y: [M, N, K]; gamma/beta: [1, N, 1], [N, 1] or [N]. Returns [M, N, K]."""
    M, N, K = y.shape
    gamma = jnp.asarray(gamma).reshape(N, 1)
    beta = jnp.asarray(beta).reshape(N, 1)

    itemsize = jnp.dtype(y.dtype).itemsize
    row_bytes = N * K * itemsize

    if row_bytes <= block_budget_bytes:
        # ---- small path: batch rows into one block (amortize ~0.35us/step), ----
        # ---- but keep >= 2 grid steps when M >= 2 so both v7x TCs get work. ----
        mb = max(1, min(M, block_budget_bytes // max(row_bytes, 1)))
        mb = min(mb, max(1, pl.cdiv(M, 2)))
        grid = (pl.cdiv(M, mb),)
        cost = pl.CostEstimate(
            flops=6 * M * N * K,
            transcendentals=M,
            bytes_accessed=2 * M * N * K * itemsize + 2 * N * 4,
        )
        return pl.pallas_call(
            _gln_small_kernel,
            out_shape=jax.ShapeDtypeStruct((M, N, K), y.dtype),
            grid_spec=pltpu.PrefetchScalarGridSpec(
                num_scalar_prefetch=0,
                grid=grid,
                in_specs=[
                    pl.BlockSpec((mb, N, K), lambda i: (i, 0, 0)),
                    pl.BlockSpec((N, 1), lambda i: (0, 0)),
                    pl.BlockSpec((N, 1), lambda i: (0, 0)),
                ],
                out_specs=pl.BlockSpec((mb, N, K), lambda i: (i, 0, 0)),
            ),
            compiler_params=pltpu.CompilerParams(
                dimension_semantics=("parallel",),
                vmem_limit_bytes=_VMEM_LIMIT,
            ),
            cost_estimate=cost,
        )(y, gamma, beta)

    # ---- tiled path: split K into lane-dense tiles; stats + normalize phases ----
    kt = max(128, _round_down(block_budget_bytes // (N * itemsize), 128))
    if kt >= K:
        kt = K                      # full extent is always a legal block dim
    nk = pl.cdiv(K, kt)
    need_mask = (K % kt) != 0

    kernel = functools.partial(
        _gln_tiled_kernel,
        kt=kt, k_total=K, inv_count=1.0 / float(N * K), need_mask=need_mask,
    )
    cost = pl.CostEstimate(
        flops=6 * M * N * K,
        transcendentals=M,
        bytes_accessed=3 * M * N * K * itemsize + 2 * N * 4,  # 2 reads + 1 write
    )
    return pl.pallas_call(
        kernel,
        out_shape=jax.ShapeDtypeStruct((M, N, K), y.dtype),
        grid_spec=pltpu.PrefetchScalarGridSpec(
            num_scalar_prefetch=0,
            grid=(M, 2, nk),
            in_specs=[
                pl.BlockSpec((1, N, kt), lambda m, p, k: (m, 0, k)),
                pl.BlockSpec((N, 1), lambda m, p, k: (0, 0)),
                pl.BlockSpec((N, 1), lambda m, p, k: (0, 0)),
            ],
            # Phase 0 parks the output window at (m, 0): same index all sweep ->
            # never flushed, never revisited after leaving. Phase 1 walks (m, k)
            # and streams the normalized tiles out.
            out_specs=pl.BlockSpec((1, N, kt), lambda m, p, k: (m, 0, k * p)),
            scratch_shapes=[
                pltpu.VMEM((N, 1), jnp.float32),   # per-channel partial sum
                pltpu.VMEM((N, 1), jnp.float32),   # per-channel partial sum of sq
                pltpu.VMEM((N, 1), jnp.float32),   # a = gamma * inv_std
                pltpu.VMEM((N, 1), jnp.float32),   # b = beta - mean * a
            ],
        ),
        compiler_params=pltpu.CompilerParams(
            dimension_semantics=("parallel", "arbitrary", "arbitrary"),
            vmem_limit_bytes=_VMEM_LIMIT,
        ),
        cost_estimate=cost,
    )(y, gamma, beta)


def reference_gln(y, gamma, beta):
    # Pure-JAX reference mirroring the PyTorch forward exactly (f32 math).
    y = y.astype(jnp.float32)
    g = jnp.asarray(gamma, jnp.float32).reshape(1, -1, 1)
    b = jnp.asarray(beta, jnp.float32).reshape(1, -1, 1)
    mean = y.mean(axis=1, keepdims=True).mean(axis=2, keepdims=True)
    var = ((y - mean) ** 2).mean(axis=1, keepdims=True).mean(axis=2, keepdims=True)
    return g * (y - mean) / jnp.power(var + EPS, 0.5) + b


if __name__ == "__main__":
    key = jax.random.PRNGKey(0)
    k1, k2, k3 = jax.random.split(key, 3)

    # 1) Small path (module's implied shapes): batch=2, channels=4, length=16.
    M, N, K = 2, 4, 16
    y = jax.random.normal(k1, (M, N, K), dtype=jnp.float32)
    gamma = jnp.ones((1, N, 1), dtype=jnp.float32)   # reset_parameters(): gamma=1
    beta = jnp.zeros((1, N, 1), dtype=jnp.float32)   # reset_parameters(): beta=0
    out = jax.block_until_ready(global_layer_norm(y, gamma, beta))
    ref = reference_gln(y, gamma, beta)
    assert out.shape == (M, N, K)
    assert jnp.allclose(out, ref, atol=1e-5, rtol=1e-5), "small-path mismatch"

    # 2) Tiled path (forced via a tiny block budget): K tiling + remainder mask.
    M2, N2, K2 = 2, 8, 200
    y2 = jax.random.normal(k2, (M2, N2, K2), dtype=jnp.float32)
    g2 = 1.0 + 0.1 * jax.random.normal(k3, (1, N2, 1), dtype=jnp.float32)
    b2 = 0.1 * jnp.ones((1, N2, 1), dtype=jnp.float32)
    out2 = jax.block_until_ready(
        global_layer_norm(y2, g2, b2, block_budget_bytes=1024))
    ref2 = reference_gln(y2, g2, b2)
    assert jnp.allclose(out2, ref2, atol=1e-4, rtol=1e-4), "tiled-path mismatch"

    # 3) bf16 I/O (halves HBM bytes; stats still accumulated in f32 in-kernel).
    y3 = jax.random.normal(k3, (2, 16, 256), dtype=jnp.bfloat16)
    g3 = jnp.ones((1, 16, 1), dtype=jnp.bfloat16)
    b3 = jnp.zeros((1, 16, 1), dtype=jnp.bfloat16)
    out3 = jax.block_until_ready(global_layer_norm(y3, g3, b3))
    ref3 = reference_gln(y3, g3, b3)
    assert jnp.allclose(out3.astype(jnp.float32), ref3, atol=5e-2, rtol=5e-2), \
        "bf16 mismatch"

    print("KERNEL_OK")
</pallas_src>

<mosaic_0001>
module attributes {stable_mosaic.version = 11 : i64} {
  func.func @_gln_small_kernel(%arg0: i32, %arg1: memref<1x4x16xf32, #tpu.memory_space<vmem>>, %arg2: memref<4x1xf32, #tpu.memory_space<vmem>>, %arg3: memref<4x1xf32, #tpu.memory_space<vmem>>, %arg4: memref<1x4x16xf32, #tpu.memory_space<vmem>>) attributes {dimension_semantics = [#tpu.dimension_semantics<parallel>], iteration_bounds = array<i64: 2>, scalar_prefetch = 0 : i64, scratch_operands = 0 : i64, tpu.core_type = #tpu.core_type<tc>, window_params = [{transform_indices = @transform_0, window_bounds = array<i64: 1, 4, 16>}, {pipeline_mode = #tpu.pipeline_mode<synchronous>, transform_indices = @transform_1, window_bounds = array<i64: 4, 1>}, {pipeline_mode = #tpu.pipeline_mode<synchronous>, transform_indices = @transform_2, window_bounds = array<i64: 4, 1>}, {transform_indices = @transform_3, window_bounds = array<i64: 1, 4, 16>}]} {
    %c0 = arith.constant 0 : index
    %c0_0 = arith.constant 0 : index
    %c0_1 = arith.constant 0 : index
    %0 = vector.load %arg1[%c0, %c0_0, %c0_1] : memref<1x4x16xf32, #tpu.memory_space<vmem>>, vector<1x4x16xf32>
    %cst = arith.constant dense<0.000000e+00> : vector<1x4xf32>
    %1 = vector.multi_reduction <add>, %0, %cst [2] : vector<1x4x16xf32> to vector<1x4xf32>
    %2 = vector.shape_cast %1 : vector<1x4xf32> to vector<1x4x1xf32>
    %cst_2 = arith.constant dense<0.000000e+00> : vector<1x1xf32>
    %3 = vector.multi_reduction <add>, %2, %cst_2 [1] : vector<1x4x1xf32> to vector<1x1xf32>
    %4 = vector.shape_cast %3 : vector<1x1xf32> to vector<1x1x1xf32>
    %5 = arith.mulf %0, %0 : vector<1x4x16xf32>
    %cst_3 = arith.constant dense<0.000000e+00> : vector<1x4xf32>
    %6 = vector.multi_reduction <add>, %5, %cst_3 [2] : vector<1x4x16xf32> to vector<1x4xf32>
    %7 = vector.shape_cast %6 : vector<1x4xf32> to vector<1x4x1xf32>
    %cst_4 = arith.constant dense<0.000000e+00> : vector<1x1xf32>
    %8 = vector.multi_reduction <add>, %7, %cst_4 [1] : vector<1x4x1xf32> to vector<1x1xf32>
    %9 = vector.shape_cast %8 : vector<1x1xf32> to vector<1x1x1xf32>
    %cst_5 = arith.constant 1.562500e-02 : f32
    %10 = vector.broadcast %cst_5 : f32 to vector<1x1x1xf32>
    %11 = arith.mulf %4, %10 : vector<1x1x1xf32>
    %cst_6 = arith.constant 1.562500e-02 : f32
    %12 = vector.broadcast %cst_6 : f32 to vector<1x1x1xf32>
    %13 = arith.mulf %9, %12 : vector<1x1x1xf32>
    %14 = arith.mulf %11, %11 : vector<1x1x1xf32>
    %15 = arith.subf %13, %14 : vector<1x1x1xf32>
    %cst_7 = arith.constant 0.000000e+00 : f32
    %16 = vector.broadcast %cst_7 : f32 to vector<1x1x1xf32>
    %17 = arith.maximumf %15, %16 : vector<1x1x1xf32>
    %cst_8 = arith.constant 9.99999993E-9 : f32
    %18 = vector.broadcast %cst_8 : f32 to vector<1x1x1xf32>
    %19 = arith.addf %17, %18 : vector<1x1x1xf32>
    %20 = math.rsqrt %19 : vector<1x1x1xf32>
    %c0_9 = arith.constant 0 : index
    %c0_10 = arith.constant 0 : index
    %21 = vector.load %arg2[%c0_9, %c0_10] : memref<4x1xf32, #tpu.memory_space<vmem>>, vector<4x1xf32>
    %22 = vector.shape_cast %21 : vector<4x1xf32> to vector<1x4x1xf32>
    %c0_11 = arith.constant 0 : index
    %c0_12 = arith.constant 0 : index
    %23 = vector.load %arg3[%c0_11, %c0_12] : memref<4x1xf32, #tpu.memory_space<vmem>>, vector<4x1xf32>
    %24 = vector.shape_cast %23 : vector<4x1xf32> to vector<1x4x1xf32>
    %25 = vector.broadcast %20 : vector<1x1x1xf32> to vector<1x4x1xf32>
    %26 = arith.mulf %22, %25 : vector<1x4x1xf32>
    %27 = vector.broadcast %11 : vector<1x1x1xf32> to vector<1x4x1xf32>
    %28 = arith.mulf %27, %26 : vector<1x4x1xf32>
    %29 = arith.subf %24, %28 : vector<1x4x1xf32>
    %30 = vector.broadcast %26 : vector<1x4x1xf32> to vector<1x4x16xf32>
    %31 = arith.mulf %0, %30 : vector<1x4x16xf32>
    %32 = vector.broadcast %29 : vector<1x4x1xf32> to vector<1x4x16xf32>
    %33 = arith.addf %31, %32 : vector<1x4x16xf32>
    %c0_13 = arith.constant 0 : index
    %c0_14 = arith.constant 0 : index
    %c0_15 = arith.constant 0 : index
    %34 = vector.load %arg4[%c0_13, %c0_14, %c0_15] : memref<1x4x16xf32, #tpu.memory_space<vmem>>, vector<1x4x16xf32>
    tpu.vector_store %arg4[%c0_13, %c0_14, %c0_15], %33 {strides = array<i32>} : memref<1x4x16xf32, #tpu.memory_space<vmem>>, vector<1x4x16xf32>,
    return
  }
  func.func @transform_0(%arg0: i32) -> (i32, i32, i32) {
    %c0_i32 = arith.constant 0 : i32
    %c0_i32_0 = arith.constant 0 : i32
    %c0_i32_1 = arith.constant 0 : i32
    return %arg0, %c0_i32, %c0_i32_0 : i32, i32, i32
  }
  func.func @transform_1(%arg0: i32) -> (i32, i32) {
    %c0_i32 = arith.constant 0 : i32
    %c0_i32_0 = arith.constant 0 : i32
    %c0_i32_1 = arith.constant 0 : i32
    return %c0_i32, %c0_i32_0 : i32, i32
  }
  func.func @transform_2(%arg0: i32) -> (i32, i32) {
    %c0_i32 = arith.constant 0 : i32
    %c0_i32_0 = arith.constant 0 : i32
    %c0_i32_1 = arith.constant 0 : i32
    return %c0_i32, %c0_i32_0 : i32, i32
  }
  func.func @transform_3(%arg0: i32) -> (i32, i32, i32) {
    %c0_i32 = arith.constant 0 : i32
    %c0_i32_0 = arith.constant 0 : i32
    %c0_i32_1 = arith.constant 0 : i32
    return %arg0, %c0_i32, %c0_i32_0 : i32, i32, i32
  }
}

</mosaic_0001>

<llo_original>
// kernel: tpu_custom_call.1
$region0: #{tpu_custom_call.1}
  #allocation0 [shape = 'u32[]', space=smem, size = 0x4, offset = 0x4, fixed_abs, tag = 'smem constant byte address 0x4 - core index']
  #allocation1 [shape = 'u32[72,128]{1,0:T(1,128)}', space=vmem, size = 0x9000, scoped, tag = 'internal scratch']
  %s0 = inlined_call_operand.vmem [shape: f32[2,4,16], index: 0, kind: input, shape index: {}]
  %s1 = inlined_call_operand.vmem [shape: f32[4,1], index: 1, kind: input, shape index: {}]
  %s2 = inlined_call_operand.vmem [shape: f32[4,1], index: 2, kind: input, shape index: {}]
  %s3 = inlined_call_operand.hbm [shape: f32[2,4,16], index: 3, kind: output, shape index: {}]
  %s4 = sld [smem:[#allocation0]]
  $region45: #{tpu_custom_call.1} parent=0
    _
  %s6 = ssub.s32 1, %s4
  %s7 = scalar_select 0, %s6, %s4
  $region1: #{tpu_custom_call.1} parent=0
    #allocation2 [shape = 'u8[4096]{0}', space=vmem, size = 0x1000, scoped, tag = 'output window, operand 0']
    #allocation3 [shape = 's32[2]{0}', space=sflag, size = 0x8, scoped, tag = 'scoped memory for tpu_custom_call.1']
    %8 = vsyncpa [#allocation3], 0
    %s9 = scalar_lea.sflag [#allocation3], 1
    %10 = vsyncpa %s9, 0
    loop: start=0, step=1, limit=4
    $region2: #{tpu_custom_call.1} parent=1 // loop_pre_header
      _
    $region3: #{tpu_custom_call.1} parent=1 // loop_header
      %s12 = sphi 0, %s16
      %p13 = scmp.ge.s32.totalorder %s12, 4
      %s22 = sphi 0, %s24
      %s25 = sphi 0, %s22
      %s26 = sphi 0, %s25
      %s42 = sphi 0, %s26
      %s46 = sphi 0, %s46
      %s48 = sphi 0, %s46
      %s49 = sphi 0, %s48
      %s63 = sphi 0, %s49
      %s67 = sphi 0, %s67
      %s69 = sphi 0, %s67
      %s70 = sphi 0, %s69
      %s84 = sphi 0, %s70
      %s90 = sphi 0, %s92
      %s93 = sphi 0, %s90
      %s94 = sphi 0, %s93
      %s110 = sphi 0, %s94
    $region4: #{tpu_custom_call.1} parent=1 // loop_header_branch
      %15 = sbr.rel (%p13) target = $region8
    $region5: #{tpu_custom_call.1} parent=1 // loop_body
      %s17 = ssub.s32 %s12, 1
      %s18 = ssub.s32 %s12, 2
      %s19 = sadd.s32 %s12, 1
      %s20 = ssub.s32 %s12, %s19
      %p21 = scmp.eq.s32.totalorder %s20, 0
      %s23 = sadd.s32 %s22, 1
      %s24 = scalar_select %p21, %s22, %s23
      %p27 = pneg %p21
      %p28 = scmp.eq.s32.totalorder %s12, 1
      %p29 = por %p27, %p28
      %p30 = scmp.ne.s32.totalorder %s22, %s25
      %p31 = scmp.eq.s32.totalorder %s12, 0
      %p32 = por %p30, %p31
      %p33 = scmp.ne.s32.totalorder %s22, %s25
      %p34 = scmp.eq.s32.totalorder %s17, 1
      %p35 = por %p33, %p34
      %p36 = scmp.ne.s32.totalorder %s25, %s26
      %p37 = scmp.eq.s32.totalorder %s17, 0
      %p38 = por %p36, %p37
      %p39 = scmp.ne.s32.totalorder %s25, %s26
      %p40 = scmp.eq.s32.totalorder %s18, 1
      %p41 = por %p39, %p40
      %p43 = scmp.ne.s32.totalorder %s26, %s42
      %p44 = scmp.eq.s32.totalorder %s18, 0
      %p45 = por %p43, %p44
      %s47 = sadd.s32 %s46, 1
      %p50 = scmp.eq.s32.totalorder %s12, 1
      %p51 = scmp.ne.s32.totalorder %s46, %s48
      %p52 = scmp.eq.s32.totalorder %s12, 0
      %p53 = por %p51, %p52
      %p54 = scmp.ne.s32.totalorder %s46, %s48
      %p55 = scmp.eq.s32.totalorder %s17, 1
      %p56 = por %p54, %p55
      %p57 = scmp.ne.s32.totalorder %s48, %s49
      %p58 = scmp.eq.s32.totalorder %s17, 0
      %p59 = por %p57, %p58
      %p60 = scmp.ne.s32.totalorder %s48, %s49
      %p61 = scmp.eq.s32.totalorder %s18, 1
      %p62 = por %p60, %p61
      %p64 = scmp.ne.s32.totalorder %s49, %s63
      %p65 = scmp.eq.s32.totalorder %s18, 0
      %p66 = por %p64, %p65
      %s68 = sadd.s32 %s67, 1
      %p71 = scmp.eq.s32.totalorder %s12, 1
      %p72 = scmp.ne.s32.totalorder %s67, %s69
      %p73 = scmp.eq.s32.totalorder %s12, 0
      %p74 = por %p72, %p73
      %p75 = scmp.ne.s32.totalorder %s67, %s69
      %p76 = scmp.eq.s32.totalorder %s17, 1
      %p77 = por %p75, %p76
      %p78 = scmp.ne.s32.totalorder %s69, %s70
      %p79 = scmp.eq.s32.totalorder %s17, 0
      %p80 = por %p78, %p79
      %p81 = scmp.ne.s32.totalorder %s69, %s70
      %p82 = scmp.eq.s32.totalorder %s18, 1
      %p83 = por %p81, %p82
      %p85 = scmp.ne.s32.totalorder %s70, %s84
      %p86 = scmp.eq.s32.totalorder %s18, 0
      %p87 = por %p85, %p86
      %s88 = ssub.s32 %s12, %s19
      %p89 = scmp.eq.s32.totalorder %s88, 0
      %s91 = sadd.s32 %s90, 1
      %s92 = scalar_select %p89, %s90, %s91
      %p95 = pneg %p89
      %p96 = scmp.eq.s32.totalorder %s12, 1
      %p97 = por %p95, %p96
      %p98 = scmp.ne.s32.totalorder %s90, %s93
      %p99 = scmp.eq.s32.totalorder %s12, 0
      %p100 = por %p98, %p99
      %p101 = scmp.ne.s32.totalorder %s90, %s93
      %p102 = scmp.eq.s32.totalorder %s17, 1
      %p103 = por %p101, %p102
      %p104 = scmp.ne.s32.totalorder %s93, %s94
      %p105 = scmp.eq.s32.totalorder %s17, 0
      %p106 = por %p104, %p105
      %p107 = scmp.ne.s32.totalorder %s93, %s94
      %p108 = scmp.eq.s32.totalorder %s18, 1
      %p109 = por %p107, %p108
      %p111 = scmp.ne.s32.totalorder %s94, %s110
      %p112 = scmp.eq.s32.totalorder %s18, 0
      %p113 = por %p111, %p112
      %p114 = scmp.le.s32.totalorder 1, %s12
      %p115 = scmp.lt.s32.totalorder %s12, 3
      %p116 = pnand %p114, %p115
      %p117 = pneg %p116
      // Predicated region
      $region9: #{tpu_custom_call.1} parent=5 // pred_check
        _
      $region10: #{tpu_custom_call.1} parent=5 // pred_check_branch
        %119 = sbr.rel (%p116) target = $region12
      $region11: #{tpu_custom_call.1} parent=5 // pred_region
        %s120 = ssub.s32 %s12, 1
        // Predicated region
        $region13: #{tpu_custom_call.1} parent=11 // pred_check
          %p121 = pneg %p59
        $region14: #{tpu_custom_call.1} parent=11 // pred_check_branch
          %123 = sbr.rel (%p121) target = $region16
        $region15: #{tpu_custom_call.1} parent=11 // pred_region
          _
        $region16: #{tpu_custom_call.1} parent=11 // pred_fallthru
          _
        // Predicated region
        $region17: #{tpu_custom_call.1} parent=11 // pred_check
          %p124 = pneg %p80
        $region18: #{tpu_custom_call.1} parent=11 // pred_check_branch
          %126 = sbr.rel (%p124) target = $region20
        $region19: #{tpu_custom_call.1} parent=11 // pred_region
          _
        $region20: #{tpu_custom_call.1} parent=11 // pred_fallthru
          _
      $region12: #{tpu_custom_call.1} parent=5 // pred_fallthru
        _
      %p127 = scmp.lt.s32.totalorder %s12, 2
      // Predicated region
      $region21: #{tpu_custom_call.1} parent=5 // pred_check
        %p128 = pneg %p127
      $region22: #{tpu_custom_call.1} parent=5 // pred_check_branch
        %130 = sbr.rel (%p128) target = $region24
      $region23: #{tpu_custom_call.1} parent=5 // pred_region
        // Predicated region
        $region25: #{tpu_custom_call.1} parent=23 // pred_check
          %p131 = pneg %p32
        $region26: #{tpu_custom_call.1} parent=23 // pred_check_branch
          %133 = sbr.rel (%p131) target = $region28
        $region27: #{tpu_custom_call.1} parent=23 // pred_region
          %p134 = scmp.lt.s32.totalorder %s12, 1
          %s135 = scalar_select %p134, %s12, 1
          %s136 = smul.addr %s135, 4
          %s137 = scalar_lea.vmem %s0, %s136
        $region28: #{tpu_custom_call.1} parent=23 // pred_fallthru
          _
      $region24: #{tpu_custom_call.1} parent=5 // pred_fallthru
        _
      %p138 = scmp.le.s32.totalorder 1, %s12
      %p139 = scmp.lt.s32.totalorder %s12, 3
      %p140 = pnand %p138, %p139
      %p141 = pneg %p140
      // Predicated region
      $region29: #{tpu_custom_call.1} parent=5 // pred_check
        _
      $region30: #{tpu_custom_call.1} parent=5 // pred_check_branch
        %143 = sbr.rel (%p140) target = $region32
      $region31: #{tpu_custom_call.1} parent=5 // pred_region
        %s144 = ssub.s32 %s12, 1
        %p145 = scmp.lt.s32.totalorder %s17, 1
        %s146 = scalar_select %p145, %s17, 1
        %s147 = smul.addr %s146, 4
        %s148 = scalar_lea.vmem %s0, %s147
        %p149 = pneg %p38
        %p150 = pneg %p35
        %p151 = pneg %p59
        %p152 = pneg %p56
        %p153 = pneg %p80
        %p154 = pneg %p77
        %p155 = pneg %p106
        %p156 = pneg %p103
        %s157 = sand.u32 %s93, 1
        %s158 = scalar_lea.sflag [#allocation3], %s157
        %s159 = sand.u32 %s93, 1
        %s160 = smul.addr %s159, 4
        %s161 = scalar_lea.vmem [#allocation2], %s160
        %p162 = scmp.lt.s32.totalorder %s17, 1
        %s163 = scalar_select %p162, %s17, 1
        %s164 = smul.addr %s163, 4
        %s165 = scalar_lea.vmem %s0, %s164
        %v166 = vld [vmem:[%s165] sm:$0xf]
        %vm167 = vcmask 125952
        %v168 = vsel %vm167, %v166, 0.0
        %169 = vadd.xlane.f32.xlu0 %v168
        %v170 = vpop.xlane.xlu0 %169
        %vm171 = vcmask 1043456
        %v172 = vsel %vm171, %v170, 0.0
        %v173 = vrot.slane %v172, 4
        %v174 = vadd.f32 %v172, %v173
        %v175 = vrot.slane %v174, 2
        %v176 = vadd.f32 %v174, %v175
        %v177 = vrot.slane %v176, 1
        %v178 = vadd.f32 %v176, %v177
        %v179 = vmul.f32 %v166, %v166
        %v180 = vsel %vm167, %v179, 0.0
        %181 = vadd.xlane.f32.xlu0 %v180
        %v182 = vpop.xlane.xlu0 %181
        %v183 = vsel %vm171, %v182, 0.0
        %v184 = vrot.slane %v183, 4
        %v185 = vadd.f32 %v183, %v184
        %v186 = vrot.slane %v185, 2
        %v187 = vadd.f32 %v185, %v186
        %v188 = vrot.slane %v187, 1
        %v189 = vadd.f32 %v187, %v188
        %v190 = vmul.f32 %v178, 0.015625
        %v191 = vmul.f32 %v189, 0.015625
        %v192 = vmul.f32 %v190, %v190
        %v193 = vsub.f32 %v191, %v192
        %v194 = vmax.f32 %v193, 0.0
        %v195 = vadd.f32 %v194, 1e-08
        %v196 = vrsqrt.pop %v195
        %v197 = vmul.f32 %v196, %v195
        %v198 = vmul.f32 %v197, %v196
        %v199 = vmul.f32 0.5, %v198
        %v200 = vsub.f32 1.5, %v199
        %v201 = vmul.f32 %v196, %v200
        %vm202 = vweird.f32 %v195
        %vm203 = vweird.f32 %v196
        %vm204 = vmor %vm202, %vm203
        %v205 = vsel %vm204, %v196, %v201
        %v206 = vld [vmem:[%s1] sm:$0xf]
        %v207 = vld [vmem:[%s2] sm:$0xf]
        %v208 = vmul.f32 %v206, %v205
        %v209 = vmul.f32 %v190, %v208
        %v210 = vsub.f32 %v207, %v209
        %212 = vset.pattern.permute.xlu0 0
        %213 = vperm.xlu0 %212, %v208
        %v214 = vpop.permute.xlu0 %213
        %v216 = vmul.f32 %v166, %v214
        %218 = vset.pattern.permute.xlu0 0
        %219 = vperm.xlu0 %218, %v210
        %v220 = vpop.permute.xlu0 %219
        %v222 = vadd.f32 %v216, %v220
        %223 = vst.msk [vmem:[%s161] sm:$0xf] %vm167, %v222
        %s224 = sand.u32 %s93, 1
        %s225 = scalar_lea.sflag [#allocation3], %s224
        %s226 = sand.u32 %s93, 1
        %s227 = smul.addr %s226, 4
        %s228 = scalar_lea.vmem [#allocation2], %s227
        // Predicated region
        $region33: #{tpu_custom_call.1} parent=31 // pred_check
          %p229 = pneg %p103
        $region34: #{tpu_custom_call.1} parent=31 // pred_check_branch
          %231 = sbr.rel (%p229) target = $region36
        $region35: #{tpu_custom_call.1} parent=31 // pred_region
          %233 = vsyncadd %s225, 0
          %s234 = smul.addr %s17, 4
          %s235 = scalar_lea.hbm %s3, %s234
          %s237 = sshll.u32 %s228, 4
          %s238 = int_to_ptr.vmem [resolvable:$true] %s237
          %s239 = sshll.u32 %s235, 4
          %s240 = int_to_ptr.hbm [resolvable:$true] %s239
          %242 = dma.vmem_to_hbm [thread:$0]  %s238, 64, %s240, %s225
        $region36: #{tpu_custom_call.1} parent=31 // pred_fallthru
          _
      $region32: #{tpu_custom_call.1} parent=5 // pred_fallthru
        _
      %p243 = scmp.le.s32.totalorder 2, %s12
      // Predicated region
      $region37: #{tpu_custom_call.1} parent=5 // pred_check
        %p244 = pneg %p243
      $region38: #{tpu_custom_call.1} parent=5 // pred_check_branch
        %246 = sbr.rel (%p244) target = $region40
      $region39: #{tpu_custom_call.1} parent=5 // pred_region
        %s247 = ssub.s32 %s12, 2
        // Predicated region
        $region41: #{tpu_custom_call.1} parent=39 // pred_check
          %p248 = pneg %p109
        $region42: #{tpu_custom_call.1} parent=39 // pred_check_branch
          %250 = sbr.rel (%p248) target = $region44
        $region43: #{tpu_custom_call.1} parent=39 // pred_region
          %s251 = sand.u32 %s94, 1
          %s252 = scalar_lea.sflag [#allocation3], %s251
          %s253 = sand.u32 %s94, 1
          %s254 = smul.addr %s253, 4
          %s255 = scalar_lea.vmem [#allocation2], %s254
          %257 = dma.done %s252, 64
        $region44: #{tpu_custom_call.1} parent=39 // pred_fallthru
          _
      $region40: #{tpu_custom_call.1} parent=5 // pred_fallthru
        _
    $region6: #{tpu_custom_call.1} parent=1 // loop_footer
      %s16 = sadd.s32 1, %s12
    $region7: #{tpu_custom_call.1} parent=1 // loop_footer_branch
      %11 = sbr.rel target = $region3
    $region8: #{tpu_custom_call.1} parent=1 // loop_exit
      _
    %258 = vsyncpa [#allocation3], 1
    %s259 = scalar_lea.sflag [#allocation3], 1
    %260 = vsyncpa %s259, 1

</llo_original>
